<compile_context>
chip_gen: v7x
topology: tpu7x:2x2x1
jax: 0.10.0
libtpu: 0.0.40
codegen_flags: <defaults>
</compile_context>

<pallas_src>
import functools

import jax
import jax.numpy as jnp
from jax.experimental import pallas as pl
from jax.experimental.pallas import tpu as pltpu


def _ls_ce_kernel(x_ref, tgt_ref, out_ref, m_ref, l_ref, ws_ref, *,
                  smoothing, num_classes, n_rows, tile_n, tile_c):
    confidence = 1.0 - smoothing
    base_w = smoothing / float(num_classes)
    top_w = confidence + base_w

    i = pl.program_id(0)
    j = pl.program_id(1)
    last_j = pl.num_programs(1) - 1

    ragged_c = (num_classes % tile_c) != 0     # static: last class block OOB?
    ragged_n = (n_rows % tile_n) != 0          # static: last row block OOB?

    @pl.when(j == 0)
    def _():
        m_ref[...] = jnp.full(m_ref.shape, -jnp.inf, jnp.float32)
        l_ref[...] = jnp.zeros_like(l_ref)
        ws_ref[...] = jnp.zeros_like(ws_ref)

    x = x_ref[...].astype(jnp.float32)          # (tile_n, tile_c)
    tgt = tgt_ref[...]                          # (tile_n, 1) int32

    # Keep rows past the true batch finite (stale VMEM could hold anything);
    # they are masked again with a select at the final reduce.
    if ragged_n:
        row = jax.lax.broadcasted_iota(jnp.int32, x.shape, 0)
        x = jnp.where((i * tile_n + row) < n_rows, x, 0.0)

    # Global class id of every lane in this block.
    col = j * tile_c + jax.lax.broadcasted_iota(jnp.int32, x.shape, 1)
    lane_ok = (col < num_classes) if ragged_c else None

    # Fused weighted reduce:  sum_c w_c * x_c  with
    #   w_c = confidence*onehot_c + smoothing/C   (weights sum to 1);
    # the weight tensor is folded into the reduce operand (never materialized).
    contrib = jnp.where(col == tgt, x * top_w, x * base_w)
    if lane_ok is not None:
        contrib = jnp.where(lane_ok, contrib, 0.0)
    ws_ref[...] += jnp.sum(contrib, axis=-1, keepdims=True)

    # Online (flash-style) log-sum-exp along the class axis.
    x_for_max = jnp.where(lane_ok, x, -jnp.inf) if lane_ok is not None else x
    m_prev = m_ref[...]
    m_new = jnp.maximum(m_prev, jnp.max(x_for_max, axis=-1, keepdims=True))
    e = jnp.exp(x - m_new)
    if lane_ok is not None:
        e = jnp.where(lane_ok, e, 0.0)
    l_ref[...] = jnp.exp(m_prev - m_new) * l_ref[...] + jnp.sum(
        e, axis=-1, keepdims=True)
    m_ref[...] = m_new

    @pl.when(j == last_j)
    def _():
        # loss_row = lse - sum_c w_c * x_c = m + log(l) - ws
        loss_rows = m_ref[...] + jnp.log(l_ref[...]) - ws_ref[...]
        if ragged_n:
            row = jax.lax.broadcasted_iota(jnp.int32, loss_rows.shape, 0)
            loss_rows = jnp.where((i * tile_n + row) < n_rows, loss_rows, 0.0)
        # One partial sum per row tile (no per-row lane-width-1 stores).
        out_ref[...] = jnp.sum(loss_rows).reshape(1, 1, 1)


def _round_up(v, m):
    return ((v + m - 1) // m) * m


def _tpu_generation():
    try:
        kind = jax.devices()[0].device_kind.lower()
    except Exception:
        return "unknown"
    if "v7" in kind:
        return "v7x"
    if "v6" in kind:
        return "v6e"
    if "v5" in kind and ("lite" in kind or "v5e" in kind):
        return "v5e"
    return "unknown"


def _pick_tiles(n, c, itemsize):
    """Pick (tile_n, tile_c, vmem_limit) with gen-aware budgets.

    x blocks target ~2-4 MiB (per-step overhead ~0.35us becomes negligible);
    the VMEM accounting covers 2 input buffers, ~4 block-sized f32
    temporaries, the lane-padded target (2 buffers) and 3 lane-padded f32
    scratch rows."""
    gen = _tpu_generation()
    if gen == "v7x":
        x_budget, vmem_cap = 4 << 20, 48 << 20      # 64 MiB physical per TC
    elif gen == "v6e":
        x_budget, vmem_cap = 4 << 20, 64 << 20
    elif gen == "v5e":
        x_budget, vmem_cap = 2 << 20, 32 << 20      # slower HBM, smaller VMEM
    else:
        x_budget, vmem_cap = 2 << 20, 32 << 20      # conservative default

    n_up = _round_up(n, 8)

    # Class tile: full C if a >=256-row block still fits the x budget,
    # otherwise a multiple of 128 sized to the budget (online-LSE path).
    min_rows = min(n_up, 256)
    if c <= 128 or min_rows * c * itemsize <= x_budget:
        tile_c = c
    else:
        tile_c = max(128, (x_budget // (min_rows * itemsize)) // 128 * 128)
        tile_c = min(tile_c, _round_up(c, 128))

    # Row tile: fill the x-block budget, then clamp to the honest working set.
    tile_n = x_budget // max(1, tile_c * itemsize)
    tile_n = max(8, min(_round_up(int(tile_n), 8), n_up))

    per_row = (2 * tile_c * itemsize      # x, double buffered (input dtype)
               + 4 * tile_c * 4           # f32 temps: x_f32, e, contrib, iota
               + 2 * 128 * 4              # lane-padded target, double buffered
               + 3 * 128 * 4)             # m / l / ws scratch (lane padded)
    max_rows = int(0.6 * vmem_cap) // per_row
    tile_n = max(8, min(tile_n, (max_rows // 8) * 8, n_up))

    # v7x megacore: keep the number of row tiles even so both TensorCores
    # get balanced work (no effect on single-TC v5e/v6e).
    if gen == "v7x":
        nt = -(-n // tile_n)
        if nt % 2 == 1 and n_up >= 16:
            tile_n = max(8, _round_up(-(-n_up // (nt + 1)), 8))

    return tile_n, tile_c, vmem_cap


def label_smoothing_cross_entropy(x, target, *, smoothing=0.1,
                                  tile_n=None, tile_c=None):
    """x: (N, C) float logits (f32 or bf16); target: (N,) int class indices.

    Returns the scalar label-smoothed cross-entropy (mean over rows), matching
    the PyTorch LabelSmoothingCrossEntropy forward."""
    n, c = x.shape
    itemsize = jnp.dtype(x.dtype).itemsize
    auto_tn, auto_tc, vmem_cap = _pick_tiles(n, c, itemsize)

    if tile_n is None:
        tile_n = auto_tn
    if tile_c is None:
        tile_c = auto_tc
    tile_n = max(8, (int(tile_n) // 8) * 8)
    tile_c = min(int(tile_c), c)
    if tile_c != c:                       # class tiles must be lane-aligned
        tile_c = max(128, (tile_c // 128) * 128)

    num_row_tiles = -(-n // tile_n)
    num_class_tiles = -(-c // tile_c)

    tgt2d = target.astype(jnp.int32).reshape(n, 1)

    kernel = functools.partial(
        _ls_ce_kernel,
        smoothing=float(smoothing),
        num_classes=c,
        n_rows=n,
        tile_n=tile_n,
        tile_c=tile_c,
    )

    # Only if VMEM forces small x blocks on a long class loop: deepen the
    # pipeline instead of shrinking further (mainly helps v7x's fast HBM).
    x_spec_kwargs = {}
    if num_class_tiles > 2 and tile_n * tile_c * itemsize < (1 << 20):
        x_spec_kwargs["pipeline_mode"] = pl.Buffered(3)
    x_spec = pl.BlockSpec((tile_n, tile_c), lambda i, j: (i, j),
                          **x_spec_kwargs)

    partial_sums = pl.pallas_call(
        kernel,
        out_shape=jax.ShapeDtypeStruct((num_row_tiles, 1, 1), jnp.float32),
        grid_spec=pltpu.PrefetchScalarGridSpec(
            num_scalar_prefetch=0,
            grid=(num_row_tiles, num_class_tiles),
            in_specs=[
                x_spec,
                pl.BlockSpec((tile_n, 1), lambda i, j: (i, 0)),
            ],
            out_specs=pl.BlockSpec((1, 1, 1), lambda i, j: (i, 0, 0)),
            scratch_shapes=[
                pltpu.VMEM((tile_n, 1), jnp.float32),   # running max
                pltpu.VMEM((tile_n, 1), jnp.float32),   # running exp-sum
                pltpu.VMEM((tile_n, 1), jnp.float32),   # running weighted sum
            ],
        ),
        compiler_params=pltpu.CompilerParams(
            dimension_semantics=("parallel", "arbitrary"),
            vmem_limit_bytes=int(vmem_cap),
        ),
    )(x, tgt2d)

    # Final mean over the true number of rows (cheap glue).
    return jnp.sum(partial_sums) / jnp.float32(n)


def _reference(x, target, smoothing=0.1):
    confidence = 1.0 - smoothing
    logprobs = jax.nn.log_softmax(x.astype(jnp.float32), axis=-1)
    nll = -jnp.take_along_axis(logprobs, target[:, None], axis=-1)[:, 0]
    smooth = -jnp.mean(logprobs, axis=-1)
    return jnp.mean(confidence * nll + smoothing * smooth)


if __name__ == "__main__":
    key = jax.random.PRNGKey(0)

    # Case 1: clean shapes, single class tile (matches the module's (B, C) use).
    kx, kt = jax.random.split(key)
    N, C = 32, 128
    x = jax.random.normal(kx, (N, C), dtype=jnp.float32)
    target = jax.random.randint(kt, (N,), 0, C, dtype=jnp.int32)
    loss = jax.block_until_ready(
        label_smoothing_cross_entropy(x, target, smoothing=0.1))
    ref = _reference(x, target, smoothing=0.1)
    assert jnp.allclose(loss, ref, rtol=1e-5, atol=1e-5), (loss, ref)

    # Case 2: ragged batch (cdiv row grid + in-kernel row masking).
    kx2, kt2 = jax.random.split(kt)
    N2, C2 = 20, 128
    x2 = jax.random.normal(kx2, (N2, C2), dtype=jnp.float32)
    target2 = jax.random.randint(kt2, (N2,), 0, C2, dtype=jnp.int32)
    loss2 = jax.block_until_ready(
        label_smoothing_cross_entropy(x2, target2, smoothing=0.1))
    ref2 = _reference(x2, target2, smoothing=0.1)
    assert jnp.allclose(loss2, ref2, rtol=1e-5, atol=1e-5), (loss2, ref2)

    # Case 3: class-axis tiling with online LSE + ragged last class block
    # (forced small tiles to exercise the large-C path at small shapes).
    kx3, kt3 = jax.random.split(kt2)
    N3, C3 = 24, 200
    x3 = jax.random.normal(kx3, (N3, C3), dtype=jnp.float32)
    target3 = jax.random.randint(kt3, (N3,), 0, C3, dtype=jnp.int32)
    loss3 = jax.block_until_ready(
        label_smoothing_cross_entropy(x3, target3, smoothing=0.1,
                                      tile_n=8, tile_c=128))
    ref3 = _reference(x3, target3, smoothing=0.1)
    assert jnp.allclose(loss3, ref3, rtol=1e-5, atol=1e-5), (loss3, ref3)

    print("KERNEL_OK")
</pallas_src>

<mosaic_0001>
module attributes {stable_mosaic.version = 11 : i64} {
  func.func @_ls_ce_kernel(%arg0: i32, %arg1: i32, %arg2: memref<32x128xf32, #tpu.memory_space<vmem>>, %arg3: memref<32x1xi32, #tpu.memory_space<vmem>>, %arg4: memref<1x1x1xf32, #tpu.memory_space<vmem>>, %arg5: memref<32x1xf32, #tpu.memory_space<vmem>>, %arg6: memref<32x1xf32, #tpu.memory_space<vmem>>, %arg7: memref<32x1xf32, #tpu.memory_space<vmem>>) attributes {dimension_semantics = [#tpu.dimension_semantics<parallel>, #tpu.dimension_semantics<arbitrary>], iteration_bounds = array<i64: 1, 1>, scalar_prefetch = 0 : i64, scratch_operands = 3 : i64, tpu.core_type = #tpu.core_type<tc>, window_params = [{transform_indices = @transform_0, window_bounds = array<i64: 32, 128>}, {transform_indices = @transform_1, window_bounds = array<i64: 32, 1>}, {transform_indices = @transform_2, window_bounds = array<i64: 1, 1, 1>}]} {
    %c0_i32 = arith.constant 0 : i32
    %0 = arith.cmpi eq, %arg1, %c0_i32 : i32
    %1 = arith.extui %0 : i1 to i32
    %c0_i32_0 = arith.constant 0 : i32
    %2 = arith.cmpi ne, %1, %c0_i32_0 : i32
    scf.if %2 {
      %cst_22 = arith.constant 0xFF800000 : f32
      %40 = vector.broadcast %cst_22 : f32 to vector<32x1xf32>
      %c0_23 = arith.constant 0 : index
      %c0_24 = arith.constant 0 : index
      %41 = vector.load %arg5[%c0_23, %c0_24] : memref<32x1xf32, #tpu.memory_space<vmem>>, vector<32x1xf32>
      tpu.vector_store %arg5[%c0_23, %c0_24], %40 {strides = array<i32>} : memref<32x1xf32, #tpu.memory_space<vmem>>, vector<32x1xf32>,
      %cst_25 = arith.constant 0.000000e+00 : f32
      %42 = vector.broadcast %cst_25 : f32 to vector<32x1xf32>
      %c0_26 = arith.constant 0 : index
      %c0_27 = arith.constant 0 : index
      %43 = vector.load %arg6[%c0_26, %c0_27] : memref<32x1xf32, #tpu.memory_space<vmem>>, vector<32x1xf32>
      tpu.vector_store %arg6[%c0_26, %c0_27], %42 {strides = array<i32>} : memref<32x1xf32, #tpu.memory_space<vmem>>, vector<32x1xf32>,
      %cst_28 = arith.constant 0.000000e+00 : f32
      %44 = vector.broadcast %cst_28 : f32 to vector<32x1xf32>
      %c0_29 = arith.constant 0 : index
      %c0_30 = arith.constant 0 : index
      %45 = vector.load %arg7[%c0_29, %c0_30] : memref<32x1xf32, #tpu.memory_space<vmem>>, vector<32x1xf32>
      tpu.vector_store %arg7[%c0_29, %c0_30], %44 {strides = array<i32>} : memref<32x1xf32, #tpu.memory_space<vmem>>, vector<32x1xf32>,
    } else {
    }
    %c0 = arith.constant 0 : index
    %c0_1 = arith.constant 0 : index
    %3 = vector.load %arg2[%c0, %c0_1] : memref<32x128xf32, #tpu.memory_space<vmem>>, vector<32x128xf32>
    %c0_2 = arith.constant 0 : index
    %c0_3 = arith.constant 0 : index
    %4 = vector.load %arg3[%c0_2, %c0_3] : memref<32x1xi32, #tpu.memory_space<vmem>>, vector<32x1xi32>
    %c128_i32 = arith.constant 128 : i32
    %5 = arith.muli %arg1, %c128_i32 : i32
    %6 = tpu.iota {dimensions = array<i32: 1>} : vector<32x128xi32>
    %7 = vector.broadcast %5 : i32 to vector<32x128xi32>
    %8 = arith.addi %7, %6 : vector<32x128xi32>
    %9 = vector.broadcast %4 : vector<32x1xi32> to vector<32x128xi32>
    %10 = arith.cmpi eq, %8, %9 : vector<32x128xi32>
    %cst = arith.constant 0.900781273 : f32
    %11 = vector.broadcast %cst : f32 to vector<32x128xf32>
    %12 = arith.mulf %3, %11 : vector<32x128xf32>
    %cst_4 = arith.constant 7.812500e-04 : f32
    %13 = vector.broadcast %cst_4 : f32 to vector<32x128xf32>
    %14 = arith.mulf %3, %13 : vector<32x128xf32>
    %15 = arith.select %10, %12, %14 : vector<32x128xi1>, vector<32x128xf32>
    %c0_5 = arith.constant 0 : index
    %c0_6 = arith.constant 0 : index
    %16 = vector.load %arg7[%c0_5, %c0_6] : memref<32x1xf32, #tpu.memory_space<vmem>>, vector<32x1xf32>
    %cst_7 = arith.constant dense<0.000000e+00> : vector<32xf32>
    %17 = vector.multi_reduction <add>, %15, %cst_7 [1] : vector<32x128xf32> to vector<32xf32>
    %18 = vector.shape_cast %17 : vector<32xf32> to vector<32x1xf32>
    %19 = arith.addf %16, %18 : vector<32x1xf32>
    %c0_8 = arith.constant 0 : index
    %c0_9 = arith.constant 0 : index
    %20 = vector.load %arg7[%c0_8, %c0_9] : memref<32x1xf32, #tpu.memory_space<vmem>>, vector<32x1xf32>
    tpu.vector_store %arg7[%c0_8, %c0_9], %19 {strides = array<i32>} : memref<32x1xf32, #tpu.memory_space<vmem>>, vector<32x1xf32>,
    %c0_10 = arith.constant 0 : index
    %c0_11 = arith.constant 0 : index
    %21 = vector.load %arg5[%c0_10, %c0_11] : memref<32x1xf32, #tpu.memory_space<vmem>>, vector<32x1xf32>
    %cst_12 = arith.constant dense<0xFF800000> : vector<32xf32>
    %22 = vector.multi_reduction <maximumf>, %3, %cst_12 [1] : vector<32x128xf32> to vector<32xf32>
    %23 = vector.shape_cast %22 : vector<32xf32> to vector<32x1xf32>
    %24 = arith.maximumf %21, %23 : vector<32x1xf32>
    %25 = vector.broadcast %24 : vector<32x1xf32> to vector<32x128xf32>
    %26 = arith.subf %3, %25 : vector<32x128xf32>
    %27 = math.exp %26 : vector<32x128xf32>
    %28 = arith.subf %21, %24 : vector<32x1xf32>
    %29 = math.exp %28 : vector<32x1xf32>
    %c0_13 = arith.constant 0 : index
    %c0_14 = arith.constant 0 : index
    %30 = vector.load %arg6[%c0_13, %c0_14] : memref<32x1xf32, #tpu.memory_space<vmem>>, vector<32x1xf32>
    %31 = arith.mulf %29, %30 : vector<32x1xf32>
    %cst_15 = arith.constant dense<0.000000e+00> : vector<32xf32>
    %32 = vector.multi_reduction <add>, %27, %cst_15 [1] : vector<32x128xf32> to vector<32xf32>
    %33 = vector.shape_cast %32 : vector<32xf32> to vector<32x1xf32>
    %34 = arith.addf %31, %33 : vector<32x1xf32>
    %c0_16 = arith.constant 0 : index
    %c0_17 = arith.constant 0 : index
    %35 = vector.load %arg6[%c0_16, %c0_17] : memref<32x1xf32, #tpu.memory_space<vmem>>, vector<32x1xf32>
    tpu.vector_store %arg6[%c0_16, %c0_17], %34 {strides = array<i32>} : memref<32x1xf32, #tpu.memory_space<vmem>>, vector<32x1xf32>,
    %c0_18 = arith.constant 0 : index
    %c0_19 = arith.constant 0 : index
    %36 = vector.load %arg5[%c0_18, %c0_19] : memref<32x1xf32, #tpu.memory_space<vmem>>, vector<32x1xf32>
    tpu.vector_store %arg5[%c0_18, %c0_19], %24 {strides = array<i32>} : memref<32x1xf32, #tpu.memory_space<vmem>>, vector<32x1xf32>,
    %c0_i32_20 = arith.constant 0 : i32
    %37 = arith.cmpi eq, %arg1, %c0_i32_20 : i32
    %38 = arith.extui %37 : i1 to i32
    %c0_i32_21 = arith.constant 0 : i32
    %39 = arith.cmpi ne, %38, %c0_i32_21 : i32
    scf.if %39 {
      %c0_22 = arith.constant 0 : index
      %c0_23 = arith.constant 0 : index
      %40 = vector.load %arg5[%c0_22, %c0_23] : memref<32x1xf32, #tpu.memory_space<vmem>>, vector<32x1xf32>
      %c0_24 = arith.constant 0 : index
      %c0_25 = arith.constant 0 : index
      %41 = vector.load %arg6[%c0_24, %c0_25] : memref<32x1xf32, #tpu.memory_space<vmem>>, vector<32x1xf32>
      %42 = math.log %41 : vector<32x1xf32>
      %43 = arith.addf %40, %42 : vector<32x1xf32>
      %c0_26 = arith.constant 0 : index
      %c0_27 = arith.constant 0 : index
      %44 = vector.load %arg7[%c0_26, %c0_27] : memref<32x1xf32, #tpu.memory_space<vmem>>, vector<32x1xf32>
      %45 = arith.subf %43, %44 : vector<32x1xf32>
      %46 = vector.shape_cast %45 : vector<32x1xf32> to vector<1x32x1xf32>
      %cst_28 = arith.constant dense<0.000000e+00> : vector<1xf32>
      %47 = vector.multi_reduction <add>, %46, %cst_28 [1, 2] : vector<1x32x1xf32> to vector<1xf32>
      %48 = vector.shape_cast %47 : vector<1xf32> to vector<1x1x1xf32>
      %49 = vector.extract %48[0, 0, 0] : f32 from vector<1x1x1xf32>
      %50 = vector.broadcast %49 : f32 to vector<1x1x1xf32>
      %c0_29 = arith.constant 0 : index
      %c0_30 = arith.constant 0 : index
      %c0_31 = arith.constant 0 : index
      %51 = vector.load %arg4[%c0_29, %c0_30, %c0_31] : memref<1x1x1xf32, #tpu.memory_space<vmem>>, vector<1x1x1xf32>
      tpu.vector_store %arg4[%c0_29, %c0_30, %c0_31], %50 {strides = array<i32>} : memref<1x1x1xf32, #tpu.memory_space<vmem>>, vector<1x1x1xf32>,
    } else {
    }
    return
  }
  func.func @transform_0(%arg0: i32, %arg1: i32) -> (i32, i32) {
    %c0_i32 = arith.constant 0 : i32
    return %arg0, %arg1 : i32, i32
  }
  func.func @transform_1(%arg0: i32, %arg1: i32) -> (i32, i32) {
    %c0_i32 = arith.constant 0 : i32
    %c0_i32_0 = arith.constant 0 : i32
    return %arg0, %c0_i32 : i32, i32
  }
  func.func @transform_2(%arg0: i32, %arg1: i32) -> (i32, i32, i32) {
    %c0_i32 = arith.constant 0 : i32
    %c0_i32_0 = arith.constant 0 : i32
    %c0_i32_1 = arith.constant 0 : i32
    return %arg0, %c0_i32, %c0_i32_0 : i32, i32, i32
  }
}

</mosaic_0001>

<llo_original>
// kernel: tpu_custom_call.1
$region0: #{tpu_custom_call.1}
  #allocation0 [shape = 'u32[]', space=smem, size = 0x4, offset = 0x4, fixed_abs, tag = 'smem constant byte address 0x4 - core index']
  #allocation1 [shape = 'u32[144,128]{1,0:T(1,128)}', space=vmem, size = 0x12000, scoped, tag = 'internal scratch']
  #allocation2 [shape = 'f32[32,1]{1,0:T(8,128)}', space=vmem, size = 0x4000, scoped, tag = 'scratch operand']
  #allocation3 [shape = 'f32[32,1]{1,0:T(8,128)}', space=vmem, size = 0x4000, scoped, tag = 'scratch operand']
  #allocation4 [shape = 'f32[32,1]{1,0:T(8,128)}', space=vmem, size = 0x4000, scoped, tag = 'scratch operand']
  %s0 = inlined_call_operand.vmem [shape: f32[32,128], index: 0, kind: input, shape index: {}]
  %s1 = inlined_call_operand.vmem [shape: s32[32,1], index: 1, kind: input, shape index: {}]
  %s2 = inlined_call_operand.hbm [shape: f32[1,1,1], index: 2, kind: output, shape index: {}]
  %s3 = sld [smem:[#allocation0]]
  $region26: #{tpu_custom_call.1} parent=0
    _
  %s5 = ssub.s32 1, %s3
  %s6 = scalar_select 0, %s5, %s3
  $region1: #{tpu_custom_call.1} parent=0
    #allocation5 [shape = 'u8[512]{0}', space=vmem, size = 0x400, scoped, tag = 'output window, operand 0, single buffered']
    #allocation6 [shape = 's32[1]{0}', space=sflag, size = 0x4, scoped, tag = 'scoped memory for tpu_custom_call.1']
    %7 = vsyncpa [#allocation6], 0
    // Predicated region
    $region2: #{tpu_custom_call.1} parent=1 // pred_check
      _
    $region3: #{tpu_custom_call.1} parent=1 // pred_check_branch
      %9 = sbr.rel (0) target = $region5
    $region4: #{tpu_custom_call.1} parent=1 // pred_region
      _
    $region5: #{tpu_custom_call.1} parent=1 // pred_fallthru
      _
    // Predicated region
    $region6: #{tpu_custom_call.1} parent=1 // pred_check
      _
    $region7: #{tpu_custom_call.1} parent=1 // pred_check_branch
      %11 = sbr.rel (0) target = $region9
    $region8: #{tpu_custom_call.1} parent=1 // pred_region
      _
    $region9: #{tpu_custom_call.1} parent=1 // pred_fallthru
      _
    %p12 = scmp.eq.s32.totalorder 0, 0
    // Predicated region
    $region10: #{tpu_custom_call.1} parent=1 // pred_check
      %p13 = pneg %p12
    $region11: #{tpu_custom_call.1} parent=1 // pred_check_branch
      %15 = sbr.rel (%p13) target = $region13
    $region12: #{tpu_custom_call.1} parent=1 // pred_region
      %vm16 = vcmask 7168
      %17 = vst.msk [vmem:[#allocation2] sm:$0xff] %vm16, -inf
      %18 = vst.msk [vmem:[#allocation2 + $0x8] sm:$0xff] %vm16, -inf
      %19 = vst.msk [vmem:[#allocation2 + $0x10] sm:$0xff] %vm16, -inf
      %20 = vst.msk [vmem:[#allocation2 + $0x18] sm:$0xff] %vm16, -inf
      %21 = vst.msk [vmem:[#allocation3] sm:$0xff] %vm16, 0.0
      %22 = vst.msk [vmem:[#allocation3 + $0x8] sm:$0xff] %vm16, 0.0
      %23 = vst.msk [vmem:[#allocation3 + $0x10] sm:$0xff] %vm16, 0.0
      %24 = vst.msk [vmem:[#allocation3 + $0x18] sm:$0xff] %vm16, 0.0
      %25 = vst.msk [vmem:[#allocation4] sm:$0xff] %vm16, 0.0
      %26 = vst.msk [vmem:[#allocation4 + $0x8] sm:$0xff] %vm16, 0.0
      %27 = vst.msk [vmem:[#allocation4 + $0x10] sm:$0xff] %vm16, 0.0
      %28 = vst.msk [vmem:[#allocation4 + $0x18] sm:$0xff] %vm16, 0.0
    $region13: #{tpu_custom_call.1} parent=1 // pred_fallthru
      _
    %v29 = vld [vmem:[%s0] sm:$0xff]
    %v30 = vld [vmem:[%s0 + $0x8] sm:$0xff]
    %v31 = vld [vmem:[%s0 + $0x10] sm:$0xff]
    %v32 = vld [vmem:[%s0 + $0x18] sm:$0xff]
    %v33 = vld [vmem:[%s1] sm:$0xff]
    %v34 = vld [vmem:[%s1 + $0x8] sm:$0xff]
    %v35 = vld [vmem:[%s1 + $0x10] sm:$0xff]
    %v36 = vld [vmem:[%s1 + $0x18] sm:$0xff]
    %s37 = smul.u32 0, 128
    %v38 = vlaneseq
    %v39 = vand.u32 %v38, 127
    %v40 = vstv %s37
    %v41 = vadd.s32 %v40, %v39
    %42 = vset.pattern.permute.xlu0 0
    %43 = vperm.xlu0 %42, %v33
    %v44 = vpop.permute.xlu0 %43
    %45 = vset.pattern.permute.xlu0 0
    %46 = vperm.xlu0 %45, %v34
    %v47 = vpop.permute.xlu0 %46
    %48 = vset.pattern.permute.xlu0 0
    %49 = vperm.xlu0 %48, %v35
    %v50 = vpop.permute.xlu0 %49
    %51 = vset.pattern.permute.xlu0 0
    %52 = vperm.xlu0 %51, %v36
    %v53 = vpop.permute.xlu0 %52
    %vm54 = vcmp.eq.s32.totalorder %v41, %v44
    %vm55 = vcmp.eq.s32.totalorder %v41, %v47
    %vm56 = vcmp.eq.s32.totalorder %v41, %v50
    %vm57 = vcmp.eq.s32.totalorder %v41, %v53
    %v58 = vmul.f32 %v29, 0.9007813
    %v59 = vmul.f32 %v30, 0.9007813
    %v60 = vmul.f32 %v31, 0.9007813
    %v61 = vmul.f32 %v32, 0.9007813
    %v62 = vmul.f32 %v29, 0.00078125
    %v63 = vmul.f32 %v30, 0.00078125
    %v64 = vmul.f32 %v31, 0.00078125
    %v65 = vmul.f32 %v32, 0.00078125
    %v66 = vsel %vm54, %v58, %v62
    %v67 = vsel %vm55, %v59, %v63
    %v68 = vsel %vm56, %v60, %v64
    %v69 = vsel %vm57, %v61, %v65
    %v70 = vld [vmem:[#allocation4] sm:$0xff]
    %v71 = vld [vmem:[#allocation4 + $0x8] sm:$0xff]
    %v72 = vld [vmem:[#allocation4 + $0x10] sm:$0xff]
    %v73 = vld [vmem:[#allocation4 + $0x18] sm:$0xff]
    %74 = vadd.xlane.f32.xlu0 %v66
    %v75 = vpop.xlane.xlu0 %74
    %76 = vadd.xlane.f32.xlu0 %v67
    %v77 = vpop.xlane.xlu0 %76
    %78 = vadd.xlane.f32.xlu0 %v68
    %v79 = vpop.xlane.xlu0 %78
    %80 = vadd.xlane.f32.xlu0 %v69
    %v81 = vpop.xlane.xlu0 %80
    %v82 = vadd.f32 %v70, %v75
    %v83 = vadd.f32 %v71, %v77
    %v84 = vadd.f32 %v72, %v79
    %v85 = vadd.f32 %v73, %v81
    %vm86 = vcmask 7168
    %87 = vst.msk [vmem:[#allocation4] sm:$0xff] %vm86, %v82
    %88 = vst.msk [vmem:[#allocation4 + $0x8] sm:$0xff] %vm86, %v83
    %89 = vst.msk [vmem:[#allocation4 + $0x10] sm:$0xff] %vm86, %v84
    %90 = vst.msk [vmem:[#allocation4 + $0x18] sm:$0xff] %vm86, %v85
    %v91 = vld [vmem:[#allocation2] sm:$0xff]
    %v92 = vld [vmem:[#allocation2 + $0x8] sm:$0xff]
    %v93 = vld [vmem:[#allocation2 + $0x10] sm:$0xff]
    %v94 = vld [vmem:[#allocation2 + $0x18] sm:$0xff]
    %95 = vmax.xlane.f32.xlu0 %v29
    %v96 = vpop.xlane.xlu0 %95
    %97 = vmax.xlane.f32.xlu0 %v30
    %v98 = vpop.xlane.xlu0 %97
    %99 = vmax.xlane.f32.xlu0 %v31
    %v100 = vpop.xlane.xlu0 %99
    %101 = vmax.xlane.f32.xlu0 %v32
    %v102 = vpop.xlane.xlu0 %101
    %v103 = vmax.f32 %v91, %v96
    %v104 = vmax.f32 %v92, %v98
    %v105 = vmax.f32 %v93, %v100
    %v106 = vmax.f32 %v94, %v102
    %108 = vset.pattern.permute.xlu0 0
    %109 = vperm.xlu0 %108, %v103
    %v110 = vpop.permute.xlu0 %109
    %113 = vset.pattern.permute.xlu0 0
    %114 = vperm.xlu0 %113, %v104
    %v115 = vpop.permute.xlu0 %114
    %118 = vset.pattern.permute.xlu0 0
    %119 = vperm.xlu0 %118, %v105
    %v120 = vpop.permute.xlu0 %119
    %123 = vset.pattern.permute.xlu0 0
    %124 = vperm.xlu0 %123, %v106
    %v125 = vpop.permute.xlu0 %124
    %v127 = vsub.f32 %v29, %v110
    %v128 = vsub.f32 %v30, %v115
    %v129 = vsub.f32 %v31, %v120
    %v130 = vsub.f32 %v32, %v125
    %v131 = vmul.f32 %v127, 1.442695
    %v132 = vpow.pop %v131
    %v133 = vmul.f32 %v128, 1.442695
    %v134 = vpow.pop %v133
    %v135 = vmul.f32 %v129, 1.442695
    %v136 = vpow.pop %v135
    %v137 = vmul.f32 %v130, 1.442695
    %v138 = vpow.pop %v137
    %v139 = vsub.f32 %v91, %v103
    %v140 = vsub.f32 %v92, %v104
    %v141 = vsub.f32 %v93, %v105
    %v142 = vsub.f32 %v94, %v106
    %v143 = vmul.f32 %v139, 1.442695
    %v144 = vpow.pop %v143
    %v145 = vmul.f32 %v140, 1.442695
    %v146 = vpow.pop %v145
    %v147 = vmul.f32 %v141, 1.442695
    %v148 = vpow.pop %v147
    %v149 = vmul.f32 %v142, 1.442695
    %v150 = vpow.pop %v149
    %v151 = vld [vmem:[#allocation3] sm:$0xff]
    %v152 = vld [vmem:[#allocation3 + $0x8] sm:$0xff]
    %v153 = vld [vmem:[#allocation3 + $0x10] sm:$0xff]
    %v154 = vld [vmem:[#allocation3 + $0x18] sm:$0xff]
    %v155 = vmul.f32 %v144, %v151
    %v156 = vmul.f32 %v146, %v152
    %v157 = vmul.f32 %v148, %v153
    %v158 = vmul.f32 %v150, %v154
    %159 = vadd.xlane.f32.xlu0 %v132
    %v160 = vpop.xlane.xlu0 %159
    %161 = vadd.xlane.f32.xlu0 %v134
    %v162 = vpop.xlane.xlu0 %161
    %163 = vadd.xlane.f32.xlu0 %v136
    %v164 = vpop.xlane.xlu0 %163
    %165 = vadd.xlane.f32.xlu0 %v138
    %v166 = vpop.xlane.xlu0 %165
    %v167 = vadd.f32 %v155, %v160
    %v168 = vadd.f32 %v156, %v162
    %v169 = vadd.f32 %v157, %v164
    %v170 = vadd.f32 %v158, %v166
    %171 = vst.msk [vmem:[#allocation3] sm:$0xff] %vm86, %v167
    %172 = vst.msk [vmem:[#allocation3 + $0x8] sm:$0xff] %vm86, %v168
    %173 = vst.msk [vmem:[#allocation3 + $0x10] sm:$0xff] %vm86, %v169
    %174 = vst.msk [vmem:[#allocation3 + $0x18] sm:$0xff] %vm86, %v170
    %175 = vst.msk [vmem:[#allocation2] sm:$0xff] %vm86, %v103
    %176 = vst.msk [vmem:[#allocation2 + $0x8] sm:$0xff] %vm86, %v104
    %177 = vst.msk [vmem:[#allocation2 + $0x10] sm:$0xff] %vm86, %v105
    %178 = vst.msk [vmem:[#allocation2 + $0x18] sm:$0xff] %vm86, %v106
    // Predicated region
    $region14: #{tpu_custom_call.1} parent=1 // pred_check
      %p179 = pneg %p12
    $region15: #{tpu_custom_call.1} parent=1 // pred_check_branch
      %181 = sbr.rel (%p179) target = $region17
    $region16: #{tpu_custom_call.1} parent=1 // pred_region
      %v182 = vld [vmem:[#allocation2] sm:$0xff]
      %v183 = vld [vmem:[#allocation2 + $0x8] sm:$0xff]
      %v184 = vld [vmem:[#allocation2 + $0x10] sm:$0xff]
      %v185 = vld [vmem:[#allocation2 + $0x18] sm:$0xff]
      %v186 = vld [vmem:[#allocation3] sm:$0xff]
      %v187 = vld [vmem:[#allocation3 + $0x8] sm:$0xff]
      %v188 = vld [vmem:[#allocation3 + $0x10] sm:$0xff]
      %v189 = vld [vmem:[#allocation3 + $0x18] sm:$0xff]
      %v190 = vlog2.pop %v186
      %v191 = vmul.f32 %v190, 0.6931472
      %v192 = vlog2.pop %v187
      %v193 = vmul.f32 %v192, 0.6931472
      %v194 = vlog2.pop %v188
      %v195 = vmul.f32 %v194, 0.6931472
      %v196 = vlog2.pop %v189
      %v197 = vmul.f32 %v196, 0.6931472
      %v198 = vadd.f32 %v182, %v191
      %v199 = vadd.f32 %v183, %v193
      %v200 = vadd.f32 %v184, %v195
      %v201 = vadd.f32 %v185, %v197
      %v202 = vld [vmem:[#allocation4] sm:$0xff]
      %v203 = vld [vmem:[#allocation4 + $0x8] sm:$0xff]
      %v204 = vld [vmem:[#allocation4 + $0x10] sm:$0xff]
      %v205 = vld [vmem:[#allocation4 + $0x18] sm:$0xff]
      %v206 = vsub.f32 %v198, %v202
      %v207 = vsub.f32 %v199, %v203
      %v208 = vsub.f32 %v200, %v204
      %v209 = vsub.f32 %v201, %v205
      %v210 = vsel %vm86, %v206, 0.0
      %v211 = vsel %vm86, %v207, 0.0
      %v212 = vadd.f32 %v210, %v211
      %v213 = vsel %vm86, %v208, 0.0
      %v214 = vadd.f32 %v212, %v213
      %v215 = vsel %vm86, %v209, 0.0
      %v216 = vadd.f32 %v214, %v215
      %217 = vadd.xlane.f32.xlu0 %v216
      %v218 = vpop.xlane.xlu0 %217
      %v219 = vrot.slane %v218, 4
      %v220 = vadd.f32 %v218, %v219
      %v221 = vrot.slane %v220, 2
      %v222 = vadd.f32 %v220, %v221
      %v223 = vrot.slane %v222, 1
      %v224 = vadd.f32 %v222, %v223
      %s225 = vtos %v224
      %v226 = vstv %s225
      %vm227 = vcmask 0
      %228 = vst.msk [vmem:[#allocation5] sm:$0x1] %vm227, %v226
    $region17: #{tpu_custom_call.1} parent=1 // pred_fallthru
      _
    // Predicated region
    $region18: #{tpu_custom_call.1} parent=1 // pred_check
      _
    $region19: #{tpu_custom_call.1} parent=1 // pred_check_branch
      %230 = sbr.rel (0) target = $region21
    $region20: #{tpu_custom_call.1} parent=1 // pred_region
      %s232 = ssub.s32 16, 16
      %233 = vsyncadd [#allocation6], %s232
      %s235 = sshll.u32 [#allocation5], 4
      %s236 = int_to_ptr.vmem [resolvable:$true] %s235
      %238 = dma.vmem_to_hbm [thread:$0]  %s236, 16, %s2, [#allocation6]
    $region21: #{tpu_custom_call.1} parent=1 // pred_fallthru
      _
    // Predicated region
    $region22: #{tpu_custom_call.1} parent=1 // pred_check
      _
    $region23: #{tpu_custom_call.1} parent=1 // pred_check_branch
      %240 = sbr.rel (0) target = $region25
    $region24: #{tpu_custom_call.1} parent=1 // pred_region
      %241 = dma.done [#allocation6], 16
    $region25: #{tpu_custom_call.1} parent=1 // pred_fallthru
      _
    %242 = vsyncpa [#allocation6], 1

</llo_original>
